<compile_context>
chip_gen: v6e
topology: v6e:2x2x1
jax: 0.10.0
libtpu: 0.0.40
codegen_flags: <defaults>
</compile_context>

<pallas_src>
import functools
import math

import jax
import jax.numpy as jnp
import numpy as np
from jax.experimental import pallas as pl
from jax.experimental.pallas import tpu as pltpu


# ---------------------------------------------------------------------------
# Hardware / tiling helpers
# ---------------------------------------------------------------------------

def _vmem_capacity_bytes():
    """Physical VMEM per TensorCore; conservative fallback if query fails."""
    try:
        return int(pltpu.get_tpu_info().vmem_capacity_bytes)
    except Exception:
        return 64 << 20  # v7x per-TC (smallest of current generations)


def _vmem_limit_bytes(cap):
    """Scoped-VMEM limit for CompilerParams: >= default 32 MiB, <= physical."""
    return int(min(cap, max(32 << 20, int(cap * 0.6))))


def _lane_fold_factor(n_rows, n_cols):
    """Fold k rows into lanes so the last dim becomes a multiple of 128.

    k = 128 / gcd(C, 128) (== lcm(C,128)/C); only applied when N % k == 0.
    """
    k = 128 // math.gcd(int(n_cols), 128)
    if k > 1 and n_rows % k == 0:
        return k
    return 1


def _choose_row_tile(rows, bytes_per_row, tile_budget_bytes, num_buffers=2,
                     max_row_tile=None):
    """Pick a row tile (multiple of 8, or the full extent) within a VMEM budget.

    The grid uses pl.cdiv(rows, tile); ragged last blocks are legal (partial
    output stores are masked by Pallas, reductions mask explicitly), so the
    tile does NOT need to divide `rows` — no whole-array fallback anymore.
    """
    if rows <= 8:
        return rows
    row_cap = rows if max_row_tile is None else max(8, int(max_row_tile))
    budget_tile = tile_budget_bytes // (num_buffers * max(int(bytes_per_row), 1))
    tile = min(rows, row_cap, budget_tile)
    if tile >= rows:
        return rows  # single full-extent block (legal regardless of %8)
    return max(8, (tile // 8) * 8)


# ---------------------------------------------------------------------------
# Kernels
# ---------------------------------------------------------------------------

def _init_kernel(tile_rows, rows_valid, vec_ref, mean_ref, m2_ref,
                 pivot_ref, sum_ref, sumsq_ref):
    """Per-(folded-)channel shifted sum / sum-of-squares over a row grid.

    Emits per-lane-group mean and M2 = sum((x - mean)^2); the k lane groups
    are combined in the wrapper.  Padded rows of a ragged last tile are masked.
    """
    step = pl.program_id(0)
    v = vec_ref[...].astype(jnp.float32)                      # (tile, cols)

    @pl.when(step == 0)
    def _():
        pivot_ref[...] = v[0:1, :]                            # shift pivot
        sum_ref[...] = jnp.zeros_like(sum_ref)
        sumsq_ref[...] = jnp.zeros_like(sumsq_ref)

    row_idx = step * tile_rows + jax.lax.broadcasted_iota(jnp.int32, v.shape, 0)
    valid = row_idx < rows_valid                              # mask ragged tail
    d = jnp.where(valid, v - pivot_ref[...], 0.0)
    sum_ref[...] += jnp.sum(d, axis=0, keepdims=True)         # (1, cols)
    sumsq_ref[...] += jnp.sum(d * d, axis=0, keepdims=True)   # (1, cols)

    @pl.when(step == pl.num_programs(0) - 1)
    def _():
        n = jnp.float32(rows_valid)
        s = sum_ref[...]
        mean_ref[...] = pivot_ref[...] + s / n
        # M2 about the mean via the shifted sums; guard tiny negatives.
        m2_ref[...] = jnp.maximum(sumsq_ref[...] - s * s / n, 0.0)


def _apply_kernel(vec_ref, exp_scale_ref, bias_ref, out_ref):
    """Steady-state path: pure streaming elementwise apply.

    Compute dtype is controlled by the dtype of exp_scale/bias (f32 for f32
    inputs; native bf16/f16 for 16-bit inputs on v6e/v7x).
    """
    out_ref[...] = ((vec_ref[...] + bias_ref[...]) * exp_scale_ref[...]
                    ).astype(out_ref.dtype)


# ---------------------------------------------------------------------------
# Wrappers
# ---------------------------------------------------------------------------

def _actnorm_init_params(vector, eps, max_row_tile=None):
    """bias = -mean, scale = -log(std_unbiased + eps), computed with Pallas."""
    N, C = vector.shape
    k = _lane_fold_factor(N, C)
    rows, cols = N // k, C * k
    vec2d = vector.reshape(rows, cols)

    cap = _vmem_capacity_bytes()
    tile = _choose_row_tile(rows, cols * vector.dtype.itemsize,
                            tile_budget_bytes=int(cap * 0.30), num_buffers=2,
                            max_row_tile=max_row_tile)
    grid = (pl.cdiv(rows, tile),)

    mean_g, m2_g = pl.pallas_call(
        functools.partial(_init_kernel, tile, rows),
        out_shape=(jax.ShapeDtypeStruct((1, cols), jnp.float32),
                   jax.ShapeDtypeStruct((1, cols), jnp.float32)),
        grid=grid,
        in_specs=[pl.BlockSpec((tile, cols), lambda i: (i, 0))],
        out_specs=(pl.BlockSpec((1, cols), lambda i: (0, 0)),
                   pl.BlockSpec((1, cols), lambda i: (0, 0))),
        scratch_shapes=[pltpu.VMEM((1, cols), jnp.float32),   # pivot
                        pltpu.VMEM((1, cols), jnp.float32),   # sum
                        pltpu.VMEM((1, cols), jnp.float32)],  # sumsq
        compiler_params=pltpu.CompilerParams(
            dimension_semantics=("arbitrary",),               # sequential reduction
            vmem_limit_bytes=_vmem_limit_bytes(cap)),
    )(vec2d)

    # Combine the k lane groups (tiny (k, C) XLA op): Chan parallel combine of
    # per-group (mean, M2) with equal group sizes n_g = N // k.
    mean_g = mean_g.reshape(k, C)
    m2_g = m2_g.reshape(k, C)
    n_g = jnp.float32(rows)
    mean = jnp.mean(mean_g, axis=0)                                    # (C,)
    m2 = jnp.sum(m2_g, axis=0) + n_g * jnp.sum((mean_g - mean[None, :]) ** 2,
                                               axis=0)
    # NOTE: N == 1 gives 0/0 -> NaN, matching torch.std(unbiased=True) on a
    # single sample.
    var = m2 / jnp.float32(N - 1)
    std = jnp.sqrt(jnp.maximum(var, 0.0))
    bias = -mean
    scale = -jnp.log(std + eps)
    return scale, bias


def _actnorm_apply(vector, scale, bias, max_row_tile=None, donate_vector=False):
    """vector_out = (vector + bias) * exp(scale), gridded & lane-dense."""
    N, C = vector.shape
    out_dtype = vector.dtype

    # 16-bit floats compute natively (v6e/v7x VPUs execute bf16); f32 stays f32.
    is_16bit = jnp.issubdtype(out_dtype, jnp.floating) and out_dtype.itemsize == 2
    compute_dtype = out_dtype if is_16bit else jnp.float32

    # Tiny per-call (C,) work: done once here, not per grid step in the kernel.
    exp_scale = jnp.exp(scale.astype(jnp.float32)).astype(compute_dtype).reshape(1, C)
    bias2d = bias.astype(compute_dtype).reshape(1, C)

    # Fold rows into lanes so every vreg lane / store is used (C=32 -> k=4,
    # C=48 -> k=8, ...).
    k = _lane_fold_factor(N, C)
    rows, cols = N // k, C * k
    vec2d = vector.reshape(rows, cols)
    if k > 1:
        exp_scale = jnp.tile(exp_scale, (1, k))
        bias2d = jnp.tile(bias2d, (1, k))

    cap = _vmem_capacity_bytes()
    bytes_per_row = cols * (vector.dtype.itemsize + jnp.dtype(out_dtype).itemsize)

    # v7x megacore: guarantee >= 2 grid steps when there is enough work so the
    # "parallel" axis can be split across the two TensorCores.
    row_cap = max_row_tile
    if rows >= 16:
        two_step_cap = max(8, (rows // 2) // 8 * 8)
        row_cap = two_step_cap if row_cap is None else min(int(row_cap), two_step_cap)

    tile = _choose_row_tile(rows, bytes_per_row,
                            tile_budget_bytes=int(cap * 0.35), num_buffers=2,
                            max_row_tile=row_cap)
    grid = (pl.cdiv(rows, tile),)

    out = pl.pallas_call(
        _apply_kernel,
        out_shape=jax.ShapeDtypeStruct((rows, cols), out_dtype),
        grid=grid,
        in_specs=[pl.BlockSpec((tile, cols), lambda i: (i, 0)),
                  pl.BlockSpec((1, cols), lambda i: (0, 0)),
                  pl.BlockSpec((1, cols), lambda i: (0, 0))],
        out_specs=pl.BlockSpec((tile, cols), lambda i: (i, 0)),
        compiler_params=pltpu.CompilerParams(
            dimension_semantics=("parallel",),   # rows independent (v7x 2 TCs)
            vmem_limit_bytes=_vmem_limit_bytes(cap)),
        input_output_aliases=({0: 0} if donate_vector else {}),
    )(vec2d, exp_scale, bias2d)
    return out.reshape(N, C)


def actnorm_forward(rotation, vector, ldjs, scale, bias, initialized, eps=1e-6,
                    max_row_tile=None, donate_vector=False):
    """ActNorm forward.

    Args:
      rotation: any shape, passed through untouched.
      vector:   (N, C) float (streams in its native dtype).
      ldjs:     (N,)   float.
      scale, bias: (C,) parameters (used only when initialized != 0).
      initialized: concrete python int/bool (mirrors torch buffer `.item()`);
        must NOT be a traced value.
    Returns:
      (rotation, vector_out (N,C), ldjs_out (N,),
       scale_updated (C,), bias_updated (C,), initialized_out=1)
    """
    if int(initialized) == 0:
        # Data-dependent init: runs exactly once, like the first torch forward.
        # TODO(synk): could be fused with the apply into one pallas_call
        # (grid=(2, n_tiles)); kept as two calls since init runs only once.
        scale_new, bias_new = _actnorm_init_params(vector, eps,
                                                   max_row_tile=max_row_tile)
    else:
        scale_new = scale.astype(jnp.float32)
        bias_new = bias.astype(jnp.float32)

    vec_out = _actnorm_apply(vector, scale_new, bias_new,
                             max_row_tile=max_row_tile,
                             donate_vector=donate_vector)
    # ldjs + scale.sum(): trivial (N,) XLA op; kept out of the kernel so no
    # lane-width-1 (N,1) store is ever emitted.
    ldjs_out = ldjs + jnp.sum(scale_new)
    # TODO(synk): buffer mutation (self.initialized/.data updates) is stateful in
    # torch; here the updated scale/bias/flag are returned functionally instead.
    return rotation, vec_out, ldjs_out, scale_new, bias_new, 1


# ---------------------------------------------------------------------------
# Pure-JAX reference & self-test
# ---------------------------------------------------------------------------

def _actnorm_reference(vector, ldjs, scale, bias, initialized, eps=1e-6):
    if initialized == 0:
        bias = -jnp.mean(vector, axis=0)
        scale = -jnp.log(jnp.std(vector, axis=0, ddof=1) + eps)
    vec = (vector + bias) * jnp.exp(scale)
    return vec, ldjs + jnp.sum(scale), scale, bias


if __name__ == "__main__":
    key = jax.random.PRNGKey(0)
    k1, k2, k3 = jax.random.split(key, 3)

    # --- Small shapes consistent with the module (flow over C-dim features) ---
    N, C = 8, 32
    vector = jax.random.normal(k1, (N, C), dtype=jnp.float32) * 2.0 + 0.5
    rotation = jax.random.normal(k2, (N, 3, 3), dtype=jnp.float32)
    ldjs = jax.random.normal(k3, (N,), dtype=jnp.float32)
    scale = jnp.zeros((C,), dtype=jnp.float32)
    bias = jnp.zeros((C,), dtype=jnp.float32)

    # First call: data-dependent init path.
    rot_o, vec_o, ldjs_o, scale_o, bias_o, initialized = actnorm_forward(
        rotation, vector, ldjs, scale, bias, 0)
    jax.block_until_ready((rot_o, vec_o, ldjs_o, scale_o, bias_o))

    vec_r, ldjs_r, scale_r, bias_r = _actnorm_reference(vector, ldjs, scale, bias, 0)
    np.testing.assert_allclose(np.asarray(vec_o), np.asarray(vec_r), rtol=1e-5, atol=1e-5)
    np.testing.assert_allclose(np.asarray(ldjs_o), np.asarray(ldjs_r), rtol=1e-5, atol=1e-5)
    np.testing.assert_allclose(np.asarray(scale_o), np.asarray(scale_r), rtol=1e-5, atol=1e-5)
    np.testing.assert_allclose(np.asarray(bias_o), np.asarray(bias_r), rtol=1e-5, atol=1e-5)

    # Second call: steady-state path (no mean/var/log work runs).
    rot_o2, vec_o2, ldjs_o2, _, _, _ = actnorm_forward(
        rotation, vector, ldjs, scale_o, bias_o, initialized)
    jax.block_until_ready((rot_o2, vec_o2, ldjs_o2))
    vec_r2, ldjs_r2, _, _ = _actnorm_reference(vector, ldjs, scale_o, bias_o, 1)
    np.testing.assert_allclose(np.asarray(vec_o2), np.asarray(vec_r2), rtol=1e-5, atol=1e-5)
    np.testing.assert_allclose(np.asarray(ldjs_o2), np.asarray(ldjs_r2), rtol=1e-5, atol=1e-5)

    # --- Ragged multi-step grids: N=252, C=32 -> fold k=4 -> rows=63, tile=8,
    #     grid=cdiv(63,8)=8 with a masked 7-row last block (init + apply). ---
    N2, C2 = 252, 32
    kk1, kk2 = jax.random.split(k1)
    vector2 = jax.random.normal(kk1, (N2, C2), dtype=jnp.float32) * 1.5 + 3.0
    ldjs2 = jax.random.normal(kk2, (N2,), dtype=jnp.float32)
    rot2 = jnp.zeros((N2, 3, 3), dtype=jnp.float32)
    _, vec_o3, ldjs_o3, scale_o3, bias_o3, _ = actnorm_forward(
        rot2, vector2, ldjs2, jnp.zeros((C2,), jnp.float32),
        jnp.zeros((C2,), jnp.float32), 0, max_row_tile=8)
    jax.block_until_ready((vec_o3, ldjs_o3, scale_o3, bias_o3))
    vec_r3, ldjs_r3, scale_r3, bias_r3 = _actnorm_reference(
        vector2, ldjs2, jnp.zeros((C2,), jnp.float32),
        jnp.zeros((C2,), jnp.float32), 0)
    np.testing.assert_allclose(np.asarray(vec_o3), np.asarray(vec_r3), rtol=1e-4, atol=1e-4)
    np.testing.assert_allclose(np.asarray(ldjs_o3), np.asarray(ldjs_r3), rtol=1e-4, atol=1e-4)
    np.testing.assert_allclose(np.asarray(scale_o3), np.asarray(scale_r3), rtol=1e-4, atol=1e-4)
    np.testing.assert_allclose(np.asarray(bias_o3), np.asarray(bias_r3), rtol=1e-4, atol=1e-4)

    # --- Generalized lane folding: C=48 (not a divisor of 128) -> k=8. ---
    N3, C3 = 64, 48
    kk3, kk4 = jax.random.split(k2)
    vector3 = jax.random.normal(kk3, (N3, C3), dtype=jnp.float32) - 0.7
    ldjs3 = jax.random.normal(kk4, (N3,), dtype=jnp.float32)
    rot3 = jnp.zeros((N3, 3, 3), dtype=jnp.float32)
    _, vec_o4, ldjs_o4, scale_o4, bias_o4, _ = actnorm_forward(
        rot3, vector3, ldjs3, jnp.zeros((C3,), jnp.float32),
        jnp.zeros((C3,), jnp.float32), 0)
    jax.block_until_ready((vec_o4, ldjs_o4, scale_o4, bias_o4))
    vec_r4, ldjs_r4, scale_r4, bias_r4 = _actnorm_reference(
        vector3, ldjs3, jnp.zeros((C3,), jnp.float32),
        jnp.zeros((C3,), jnp.float32), 0)
    np.testing.assert_allclose(np.asarray(vec_o4), np.asarray(vec_r4), rtol=1e-5, atol=1e-5)
    np.testing.assert_allclose(np.asarray(ldjs_o4), np.asarray(ldjs_r4), rtol=1e-5, atol=1e-5)
    np.testing.assert_allclose(np.asarray(scale_o4), np.asarray(scale_r4), rtol=1e-5, atol=1e-5)
    np.testing.assert_allclose(np.asarray(bias_o4), np.asarray(bias_r4), rtol=1e-5, atol=1e-5)

    print("KERNEL_OK")
</pallas_src>

<mosaic_0001>
module attributes {stable_mosaic.version = 11 : i64} {
  func.func @_init_kernel(%arg0: i32, %arg1: memref<2x128xf32, #tpu.memory_space<vmem>>, %arg2: memref<1x128xf32, #tpu.memory_space<vmem>>, %arg3: memref<1x128xf32, #tpu.memory_space<vmem>>, %arg4: memref<1x128xf32, #tpu.memory_space<vmem>>, %arg5: memref<1x128xf32, #tpu.memory_space<vmem>>, %arg6: memref<1x128xf32, #tpu.memory_space<vmem>>) attributes {dimension_semantics = [#tpu.dimension_semantics<arbitrary>], iteration_bounds = array<i64: 1>, scalar_prefetch = 0 : i64, scratch_operands = 3 : i64, tpu.core_type = #tpu.core_type<tc>, window_params = [{transform_indices = @transform_0, window_bounds = array<i64: 2, 128>}, {pipeline_mode = #tpu.pipeline_mode<synchronous>, transform_indices = @transform_1, window_bounds = array<i64: 1, 128>}, {pipeline_mode = #tpu.pipeline_mode<synchronous>, transform_indices = @transform_2, window_bounds = array<i64: 1, 128>}]} {
    %c0 = arith.constant 0 : index
    %c0_0 = arith.constant 0 : index
    %0 = vector.load %arg1[%c0, %c0_0] : memref<2x128xf32, #tpu.memory_space<vmem>>, vector<2x128xf32>
    %c0_i32 = arith.constant 0 : i32
    %1 = arith.cmpi eq, %arg0, %c0_i32 : i32
    %2 = arith.extui %1 : i1 to i32
    %c0_i32_1 = arith.constant 0 : i32
    %3 = arith.cmpi ne, %2, %c0_i32_1 : i32
    scf.if %3 {
      %29 = vector.extract_strided_slice %0 {offsets = [0, 0], sizes = [1, 128], strides = [1, 1]} : vector<2x128xf32> to vector<1x128xf32>
      %c0_17 = arith.constant 0 : index
      %c0_18 = arith.constant 0 : index
      %30 = vector.load %arg4[%c0_17, %c0_18] : memref<1x128xf32, #tpu.memory_space<vmem>>, vector<1x128xf32>
      tpu.vector_store %arg4[%c0_17, %c0_18], %29 {strides = array<i32>} : memref<1x128xf32, #tpu.memory_space<vmem>>, vector<1x128xf32>,
      %cst_19 = arith.constant 0.000000e+00 : f32
      %31 = vector.broadcast %cst_19 : f32 to vector<1x128xf32>
      %c0_20 = arith.constant 0 : index
      %c0_21 = arith.constant 0 : index
      %32 = vector.load %arg5[%c0_20, %c0_21] : memref<1x128xf32, #tpu.memory_space<vmem>>, vector<1x128xf32>
      tpu.vector_store %arg5[%c0_20, %c0_21], %31 {strides = array<i32>} : memref<1x128xf32, #tpu.memory_space<vmem>>, vector<1x128xf32>,
      %cst_22 = arith.constant 0.000000e+00 : f32
      %33 = vector.broadcast %cst_22 : f32 to vector<1x128xf32>
      %c0_23 = arith.constant 0 : index
      %c0_24 = arith.constant 0 : index
      %34 = vector.load %arg6[%c0_23, %c0_24] : memref<1x128xf32, #tpu.memory_space<vmem>>, vector<1x128xf32>
      tpu.vector_store %arg6[%c0_23, %c0_24], %33 {strides = array<i32>} : memref<1x128xf32, #tpu.memory_space<vmem>>, vector<1x128xf32>,
    } else {
    }
    %c2_i32 = arith.constant 2 : i32
    %4 = arith.muli %arg0, %c2_i32 : i32
    %5 = tpu.iota {dimensions = array<i32: 0>} : vector<2x128xi32>
    %6 = vector.broadcast %4 : i32 to vector<2x128xi32>
    %7 = arith.addi %6, %5 : vector<2x128xi32>
    %c2_i32_2 = arith.constant 2 : i32
    %8 = vector.broadcast %c2_i32_2 : i32 to vector<2x128xi32>
    %9 = arith.cmpi slt, %7, %8 : vector<2x128xi32>
    %c0_3 = arith.constant 0 : index
    %c0_4 = arith.constant 0 : index
    %10 = vector.load %arg4[%c0_3, %c0_4] : memref<1x128xf32, #tpu.memory_space<vmem>>, vector<1x128xf32>
    %11 = vector.broadcast %10 : vector<1x128xf32> to vector<2x128xf32>
    %12 = arith.subf %0, %11 : vector<2x128xf32>
    %cst = arith.constant 0.000000e+00 : f32
    %13 = vector.broadcast %cst : f32 to vector<2x128xf32>
    %14 = arith.select %9, %12, %13 : vector<2x128xi1>, vector<2x128xf32>
    %c0_5 = arith.constant 0 : index
    %c0_6 = arith.constant 0 : index
    %15 = vector.load %arg5[%c0_5, %c0_6] : memref<1x128xf32, #tpu.memory_space<vmem>>, vector<1x128xf32>
    %cst_7 = arith.constant dense<0.000000e+00> : vector<128xf32>
    %16 = vector.multi_reduction <add>, %14, %cst_7 [0] : vector<2x128xf32> to vector<128xf32>
    %17 = vector.shape_cast %16 : vector<128xf32> to vector<1x128xf32>
    %18 = arith.addf %15, %17 : vector<1x128xf32>
    %c0_8 = arith.constant 0 : index
    %c0_9 = arith.constant 0 : index
    %19 = vector.load %arg5[%c0_8, %c0_9] : memref<1x128xf32, #tpu.memory_space<vmem>>, vector<1x128xf32>
    tpu.vector_store %arg5[%c0_8, %c0_9], %18 {strides = array<i32>} : memref<1x128xf32, #tpu.memory_space<vmem>>, vector<1x128xf32>,
    %c0_10 = arith.constant 0 : index
    %c0_11 = arith.constant 0 : index
    %20 = vector.load %arg6[%c0_10, %c0_11] : memref<1x128xf32, #tpu.memory_space<vmem>>, vector<1x128xf32>
    %21 = arith.mulf %14, %14 : vector<2x128xf32>
    %cst_12 = arith.constant dense<0.000000e+00> : vector<128xf32>
    %22 = vector.multi_reduction <add>, %21, %cst_12 [0] : vector<2x128xf32> to vector<128xf32>
    %23 = vector.shape_cast %22 : vector<128xf32> to vector<1x128xf32>
    %24 = arith.addf %20, %23 : vector<1x128xf32>
    %c0_13 = arith.constant 0 : index
    %c0_14 = arith.constant 0 : index
    %25 = vector.load %arg6[%c0_13, %c0_14] : memref<1x128xf32, #tpu.memory_space<vmem>>, vector<1x128xf32>
    tpu.vector_store %arg6[%c0_13, %c0_14], %24 {strides = array<i32>} : memref<1x128xf32, #tpu.memory_space<vmem>>, vector<1x128xf32>,
    %c0_i32_15 = arith.constant 0 : i32
    %26 = arith.cmpi eq, %arg0, %c0_i32_15 : i32
    %27 = arith.extui %26 : i1 to i32
    %c0_i32_16 = arith.constant 0 : i32
    %28 = arith.cmpi ne, %27, %c0_i32_16 : i32
    scf.if %28 {
      %c0_17 = arith.constant 0 : index
      %c0_18 = arith.constant 0 : index
      %29 = vector.load %arg5[%c0_17, %c0_18] : memref<1x128xf32, #tpu.memory_space<vmem>>, vector<1x128xf32>
      %c0_19 = arith.constant 0 : index
      %c0_20 = arith.constant 0 : index
      %30 = vector.load %arg4[%c0_19, %c0_20] : memref<1x128xf32, #tpu.memory_space<vmem>>, vector<1x128xf32>
      %cst_21 = arith.constant 2.000000e+00 : f32
      %31 = vector.broadcast %cst_21 : f32 to vector<1x128xf32>
      %32 = arith.divf %29, %31 : vector<1x128xf32>
      %33 = arith.addf %30, %32 : vector<1x128xf32>
      %c0_22 = arith.constant 0 : index
      %c0_23 = arith.constant 0 : index
      %34 = vector.load %arg2[%c0_22, %c0_23] : memref<1x128xf32, #tpu.memory_space<vmem>>, vector<1x128xf32>
      tpu.vector_store %arg2[%c0_22, %c0_23], %33 {strides = array<i32>} : memref<1x128xf32, #tpu.memory_space<vmem>>, vector<1x128xf32>,
      %c0_24 = arith.constant 0 : index
      %c0_25 = arith.constant 0 : index
      %35 = vector.load %arg6[%c0_24, %c0_25] : memref<1x128xf32, #tpu.memory_space<vmem>>, vector<1x128xf32>
      %36 = arith.mulf %29, %29 : vector<1x128xf32>
      %cst_26 = arith.constant 2.000000e+00 : f32
      %37 = vector.broadcast %cst_26 : f32 to vector<1x128xf32>
      %38 = arith.divf %36, %37 : vector<1x128xf32>
      %39 = arith.subf %35, %38 : vector<1x128xf32>
      %cst_27 = arith.constant 0.000000e+00 : f32
      %40 = vector.broadcast %cst_27 : f32 to vector<1x128xf32>
      %41 = arith.maximumf %39, %40 : vector<1x128xf32>
      %c0_28 = arith.constant 0 : index
      %c0_29 = arith.constant 0 : index
      %42 = vector.load %arg3[%c0_28, %c0_29] : memref<1x128xf32, #tpu.memory_space<vmem>>, vector<1x128xf32>
      tpu.vector_store %arg3[%c0_28, %c0_29], %41 {strides = array<i32>} : memref<1x128xf32, #tpu.memory_space<vmem>>, vector<1x128xf32>,
    } else {
    }
    return
  }
  func.func @transform_0(%arg0: i32) -> (i32, i32) {
    %c0_i32 = arith.constant 0 : i32
    %c0_i32_0 = arith.constant 0 : i32
    return %arg0, %c0_i32 : i32, i32
  }
  func.func @transform_1(%arg0: i32) -> (i32, i32) {
    %c0_i32 = arith.constant 0 : i32
    %c0_i32_0 = arith.constant 0 : i32
    %c0_i32_1 = arith.constant 0 : i32
    return %c0_i32, %c0_i32_0 : i32, i32
  }
  func.func @transform_2(%arg0: i32) -> (i32, i32) {
    %c0_i32 = arith.constant 0 : i32
    %c0_i32_0 = arith.constant 0 : i32
    %c0_i32_1 = arith.constant 0 : i32
    return %c0_i32, %c0_i32_0 : i32, i32
  }
}

</mosaic_0001>

<llo_original>
// kernel: tpu_custom_call.1
$region0: #{tpu_custom_call.1}
  #allocation0 [shape = 'u32[]', space=smem, size = 0x4, offset = 0x4, fixed_abs, tag = 'smem constant byte address 0x4 - core index']
  #allocation1 [shape = 'u32[144,128]{1,0:T(1,128)}', space=vmem, size = 0x12000, scoped, tag = 'internal scratch']
  #allocation2 [shape = 'f32[1,128]{1,0:T(1,128)}', space=vmem, size = 0x200, scoped, tag = 'scratch operand']
  #allocation3 [shape = 'f32[1,128]{1,0:T(1,128)}', space=vmem, size = 0x200, scoped, tag = 'scratch operand']
  #allocation4 [shape = 'f32[1,128]{1,0:T(1,128)}', space=vmem, size = 0x200, scoped, tag = 'scratch operand']
  %s0 = inlined_call_operand.hbm [shape: f32[2,128], index: 0, kind: input, shape index: {}]
  %s1 = inlined_call_operand.hbm [shape: f32[1,128], index: 1, kind: output, shape index: {0}]
  %s2 = inlined_call_operand.hbm [shape: f32[1,128], index: 2, kind: output, shape index: {1}]
  %3 = xla_tuple %s1, %s2
  %s4 = sld [smem:[#allocation0]]
  $region34: #{tpu_custom_call.1} parent=0
    _
  %s6 = ssub.s32 1, %s4
  %s7 = scalar_select 0, %s6, %s4
  $region1: #{tpu_custom_call.1} parent=0
    #allocation5 [shape = 'u8[1024]{0}', space=vmem, size = 0x400, scoped, tag = 'input window, operand 0, single buffered']
    #allocation6 [shape = 's32[1]{0}', space=sflag, size = 0x4, scoped, tag = 'scoped memory for tpu_custom_call.1']
    #allocation7 [shape = 's32[1]{0}', space=sflag, size = 0x4, scoped, tag = 'scoped memory for tpu_custom_call.1']
    #allocation8 [shape = 'u8[512]{0}', space=vmem, size = 0x400, scoped, tag = 'output window, operand 0, single buffered']
    #allocation9 [shape = 'u8[512]{0}', space=vmem, size = 0x400, scoped, tag = 'output window, operand 1, single buffered']
    #allocation10 [shape = 's32[1]{0}', space=sflag, size = 0x4, scoped, tag = 'scoped memory for tpu_custom_call.1']
    %8 = vsyncpa [#allocation6], 0
    %9 = vsyncpa [#allocation7], 0
    %10 = vsyncpa [#allocation10], 0
    // Predicated region
    $region2: #{tpu_custom_call.1} parent=1 // pred_check
      _
    $region3: #{tpu_custom_call.1} parent=1 // pred_check_branch
      %12 = sbr.rel (0) target = $region5
    $region4: #{tpu_custom_call.1} parent=1 // pred_region
      %s14 = ssub.s32 32, 32
      %15 = vsyncadd [#allocation6], %s14
      %s17 = sshll.u32 [#allocation5], 4
      %s18 = int_to_ptr.vmem [resolvable:$true] %s17
      %20 = dma.hbm_to_vmem [thread:$0]  %s0, 32, %s18, [#allocation6]
    $region5: #{tpu_custom_call.1} parent=1 // pred_fallthru
      _
    // Predicated region
    $region6: #{tpu_custom_call.1} parent=1 // pred_check
      _
    $region7: #{tpu_custom_call.1} parent=1 // pred_check_branch
      %22 = sbr.rel (0) target = $region9
    $region8: #{tpu_custom_call.1} parent=1 // pred_region
      %23 = dma.done [#allocation6], 32
    $region9: #{tpu_custom_call.1} parent=1 // pred_fallthru
      _
    %v24 = vld [vmem:[#allocation5] sm:$0x3]
    %p25 = scmp.eq.s32.totalorder 0, 0
    // Predicated region
    $region10: #{tpu_custom_call.1} parent=1 // pred_check
      %p26 = pneg %p25
    $region11: #{tpu_custom_call.1} parent=1 // pred_check_branch
      %28 = sbr.rel (%p26) target = $region13
    $region12: #{tpu_custom_call.1} parent=1 // pred_region
      %29 = vst [vmem:[#allocation2] sm:$0x1] %v24
      %30 = vst [vmem:[#allocation3] sm:$0x1] 0.0
      %31 = vst [vmem:[#allocation4] sm:$0x1] 0.0
    $region13: #{tpu_custom_call.1} parent=1 // pred_fallthru
      _
    %s32 = smul.u32 0, 2
    %v33 = vlaneseq
    %v34 = vshrl.u32 %v33, 7
    %v35 = vstv %s32
    %v36 = vadd.s32 %v35, %v34
    %vm37 = vcmp.lt.s32.totalorder %v36, 2
    %v38 = vld [vmem:[#allocation2] sm:$0x1]
    %v40 = vlaneseq
    %v41 = vshrl.u32 %v40, 7
    %v42 = vsub.s32 0, %v41
    %v43 = vrot.slane %v38, %v42
    %v45 = vsub.f32 %v24, %v43
    %v46 = vsel %vm37, %v45, 0.0
    %v47 = vld [vmem:[#allocation3] sm:$0x1]
    %vm48 = vcmask 1041408
    %v49 = vsel %vm48, %v46, 0.0
    %v50 = vrot.slane %v49, 4
    %v51 = vadd.f32 %v49, %v50
    %v52 = vrot.slane %v51, 2
    %v53 = vadd.f32 %v51, %v52
    %v54 = vrot.slane %v53, 1
    %v55 = vadd.f32 %v53, %v54
    %v56 = vadd.f32 %v47, %v55
    %57 = vst [vmem:[#allocation3] sm:$0x1] %v56
    %v58 = vld [vmem:[#allocation4] sm:$0x1]
    %v59 = vmul.f32 %v46, %v46
    %v60 = vsel %vm48, %v59, 0.0
    %v61 = vrot.slane %v60, 4
    %v62 = vadd.f32 %v60, %v61
    %v63 = vrot.slane %v62, 2
    %v64 = vadd.f32 %v62, %v63
    %v65 = vrot.slane %v64, 1
    %v66 = vadd.f32 %v64, %v65
    %v67 = vadd.f32 %v58, %v66
    %68 = vst [vmem:[#allocation4] sm:$0x1] %v67
    // Predicated region
    $region14: #{tpu_custom_call.1} parent=1 // pred_check
      %p69 = pneg %p25
    $region15: #{tpu_custom_call.1} parent=1 // pred_check_branch
      %71 = sbr.rel (%p69) target = $region17
    $region16: #{tpu_custom_call.1} parent=1 // pred_region
      %v72 = vld [vmem:[#allocation3] sm:$0x1]
      %v73 = vld [vmem:[#allocation2] sm:$0x1]
      %v74 = vrcp.pop 2.0
      %v75 = vmul.f32 %v72, %v74
      %v76 = vadd.f32 %v73, %v75
      %77 = vst [vmem:[#allocation8] sm:$0x1] %v76
      %v78 = vld [vmem:[#allocation4] sm:$0x1]
      %v79 = vmul.f32 %v72, %v72
      %v80 = vmul.f32 %v79, %v74
      %v81 = vsub.f32 %v78, %v80
      %v82 = vmax.f32 %v81, 0.0
      %83 = vst [vmem:[#allocation9] sm:$0x1] %v82
    $region17: #{tpu_custom_call.1} parent=1 // pred_fallthru
      _
    // Predicated region
    $region18: #{tpu_custom_call.1} parent=1 // pred_check
      _
    $region19: #{tpu_custom_call.1} parent=1 // pred_check_branch
      %85 = sbr.rel (0) target = $region21
    $region20: #{tpu_custom_call.1} parent=1 // pred_region
      %s87 = ssub.s32 16, 16
      %88 = vsyncadd [#allocation7], %s87
      %s90 = sshll.u32 [#allocation8], 4
      %s91 = int_to_ptr.vmem [resolvable:$true] %s90
      %93 = dma.vmem_to_hbm [thread:$0]  %s91, 16, %s1, [#allocation7]
    $region21: #{tpu_custom_call.1} parent=1 // pred_fallthru
      _
    // Predicated region
    $region22: #{tpu_custom_call.1} parent=1 // pred_check
      _
    $region23: #{tpu_custom_call.1} parent=1 // pred_check_branch
      %95 = sbr.rel (0) target = $region25
    $region24: #{tpu_custom_call.1} parent=1 // pred_region
      %s97 = ssub.s32 16, 16
      %98 = vsyncadd [#allocation10], %s97
      %s100 = sshll.u32 [#allocation9], 4
      %s101 = int_to_ptr.vmem [resolvable:$true] %s100
      %103 = dma.vmem_to_hbm [thread:$0]  %s101, 16, %s2, [#allocation10]
    $region25: #{tpu_custom_call.1} parent=1 // pred_fallthru
      _
    // Predicated region
    $region26: #{tpu_custom_call.1} parent=1 // pred_check
      _
    $region27: #{tpu_custom_call.1} parent=1 // pred_check_branch
      %105 = sbr.rel (0) target = $region29
    $region28: #{tpu_custom_call.1} parent=1 // pred_region
      %106 = dma.done [#allocation7], 16
    $region29: #{tpu_custom_call.1} parent=1 // pred_fallthru
      _
    // Predicated region
    $region30: #{tpu_custom_call.1} parent=1 // pred_check
      _
    $region31: #{tpu_custom_call.1} parent=1 // pred_check_branch
      %108 = sbr.rel (0) target = $region33
    $region32: #{tpu_custom_call.1} parent=1 // pred_region
      %109 = dma.done [#allocation10], 16
    $region33: #{tpu_custom_call.1} parent=1 // pred_fallthru
      _
    %110 = vsyncpa [#allocation6], 1
    %111 = vsyncpa [#allocation7], 1
    %112 = vsyncpa [#allocation10], 1

</llo_original>
